<compile_context>
chip_gen: v6e
topology: v6e:2x2x1
jax: 0.10.0
libtpu: 0.0.40
codegen_flags: <defaults>
</compile_context>

<pallas_src>
import functools
import math

import jax
import jax.numpy as jnp
from jax import lax
from jax.experimental import pallas as pl
from jax.experimental.pallas import tpu as pltpu


def _round_up(x, m):
    return ((x + m - 1) // m) * m


def _vmem_capacity_bytes():
    try:
        return int(pltpu.get_tpu_info().vmem_capacity_bytes)
    except Exception:
        return 64 * 1024 * 1024        # conservative (v7x per-TensorCore)


_VMEM_CAP = _vmem_capacity_bytes()
# Leave headroom for Mosaic internal scratch / semaphores:
#   128 MiB (v5e/v6e) -> 100 MiB limit / 75 MiB fused budget
#    64 MiB (v7x)     ->  40 MiB limit / 30 MiB fused budget
_VMEM_LIMIT_BYTES = min(100 * 1024 * 1024,
                        max(32 * 1024 * 1024, _VMEM_CAP - 24 * 1024 * 1024))
_FUSED_VMEM_BUDGET = (_VMEM_LIMIT_BYTES * 3) // 4


# ---------------------------------------------------------------------------
# Fused kernel:  out = PReLU( (adj @ seq) @ W_t + bias )
#   grid = (cdiv(N, tm), cdiv(N, tk))   (k = reduction over graph nodes)
#   * adj streamed unpadded; ragged tail columns masked to zero in-kernel.
#   * seq (zero-padded to (Kp, in_p)) resident in VMEM, sliced per k step.
#   * h accumulator (tm, in_p) lives only in VMEM scratch.
#   * epilogue (W_t matmul, bias, PReLU) runs once per row tile on last k.
# ---------------------------------------------------------------------------
def _gcn_fused_kernel(adj_ref, seq_ref, wt_ref, b_ref, alpha_ref, o_ref, h_acc,
                      *, tk, rem_k):
    k = pl.program_id(1)
    nk = pl.num_programs(1)

    @pl.when(k == 0)
    def _():
        h_acc[...] = jnp.zeros_like(h_acc)

    a = adj_ref[...]
    if rem_k:
        # Only the final k block overhangs the (unpadded) adj array; zero the
        # garbage columns so they cannot pollute the reduction.
        col = lax.broadcasted_iota(jnp.int32, a.shape, 1)
        limit = jnp.where(k == nk - 1, rem_k, tk)
        a = jnp.where(col < limit, a, jnp.zeros_like(a))

    start = pl.multiple_of(k * tk, tk)
    s = seq_ref[pl.ds(start, tk), :]          # VMEM-resident seq slab
    h_acc[...] += jnp.dot(a, s, preferred_element_type=jnp.float32)

    @pl.when(k == nk - 1)
    def _():
        # out = h @ W_t  (weight pre-transposed -> plain (1,0) contraction)
        out = jnp.dot(h_acc[...], wt_ref[...],
                      preferred_element_type=jnp.float32)
        out = out + b_ref[...]                # bias broadcast over rows
        alpha = alpha_ref[0]                  # scalar PReLU slope from SMEM
        o_ref[...] = jnp.where(out >= 0.0, out, alpha * out).astype(o_ref.dtype)


def _fused_vmem_bytes(tm, tk, Kp, in_p, out_p, stream_bytes):
    b = 2 * tm * tk * stream_bytes           # adj tile (double-buffered)
    b += 2 * Kp * in_p * stream_bytes        # resident seq (2 buffers reserved)
    b += 2 * in_p * out_p * 4                # weight (resident)
    b += 2 * 8 * out_p * 4                   # bias
    b += 2 * tm * out_p * 4                  # output tile
    b += tm * in_p * 4                       # h accumulator scratch
    return b


def _gcn_fused(adj, seq, w_t_p, bias_p, alpha1, *, tm, tk, out_ft):
    N = adj.shape[0]
    in_ft = seq.shape[1]
    in_p, out_p = w_t_p.shape

    nk = pl.cdiv(N, tk)
    Kp = nk * tk
    rem_k = N % tk
    # Only the *small* operand (seq) is zero-padded; adj is read in place.
    seq_p = seq if seq.shape == (Kp, in_p) else jnp.pad(
        seq, ((0, Kp - N), (0, in_p - in_ft)))

    out = pl.pallas_call(
        functools.partial(_gcn_fused_kernel, tk=tk, rem_k=rem_k),
        out_shape=jax.ShapeDtypeStruct((N, out_p), jnp.float32),
        grid_spec=pltpu.PrefetchScalarGridSpec(
            num_scalar_prefetch=0,
            grid=(pl.cdiv(N, tm), nk),
            in_specs=[
                # adj: raw, blocks may overhang (masked cols / discarded rows).
                pl.BlockSpec((tm, tk), lambda i, k: (i, k)),
                # seq: whole zero-padded array, constant index -> single DMA.
                pl.BlockSpec((Kp, in_p), lambda i, k: (0, 0)),
                # weight (pre-transposed, lane-padded), resident.
                pl.BlockSpec((in_p, out_p), lambda i, k: (0, 0)),
                pl.BlockSpec((1, out_p), lambda i, k: (0, 0)),          # bias
                pl.BlockSpec(memory_space=pltpu.MemorySpace.SMEM),      # alpha
            ],
            out_specs=pl.BlockSpec((tm, out_p), lambda i, k: (i, 0)),
            scratch_shapes=[pltpu.VMEM((tm, in_p), jnp.float32)],
        ),
        compiler_params=pltpu.CompilerParams(
            dimension_semantics=("parallel", "arbitrary"),
            vmem_limit_bytes=_VMEM_LIMIT_BYTES,
        ),
    )(adj, seq_p, w_t_p, bias_p, alpha1)
    return out if out_p == out_ft else out[:, :out_ft]


# ---------------------------------------------------------------------------
# Fallback: generic tiled  out = PReLU(a @ b + bias)  with the same
# no-padding-of-`a` scheme (masked ragged K tail, discarded OOB rows).
# `b`/`bias` (small) are zero-padded; accumulation happens directly in o_ref.
# alpha = 1 turns the epilogue into the identity (plain matmul).
# ---------------------------------------------------------------------------
def _mm_bias_prelu_kernel(a_ref, b_ref, bias_ref, alpha_ref, o_ref, *, tk, rem_k):
    k = pl.program_id(2)
    nk = pl.num_programs(2)

    @pl.when(k == 0)
    def _():
        o_ref[...] = jnp.zeros_like(o_ref)

    a = a_ref[...]
    if rem_k:
        col = lax.broadcasted_iota(jnp.int32, a.shape, 1)
        limit = jnp.where(k == nk - 1, rem_k, tk)
        a = jnp.where(col < limit, a, jnp.zeros_like(a))

    o_ref[...] += jnp.dot(a, b_ref[...], preferred_element_type=jnp.float32)

    @pl.when(k == nk - 1)
    def _():
        out = o_ref[...] + bias_ref[...]
        alpha = alpha_ref[0]
        o_ref[...] = jnp.where(out >= 0.0, out, alpha * out)


def _matmul_bias_prelu(a, b, bias, alpha, *, tm=256, tn=512, tk=512):
    """out = PReLU(a @ b + bias). a: (M, K) streamed unpadded; b: (K, Nc) small."""
    M, K = a.shape
    Nc = b.shape[1]

    tm = min(tm, _round_up(M, 8))
    tn = min(tn, _round_up(Nc, 128))
    tk = min(tk, _round_up(K, 128))
    Kp = pl.cdiv(K, tk) * tk
    Np = _round_up(Nc, tn)
    rem_k = K % tk

    b_p = b if b.shape == (Kp, Np) else jnp.pad(b, ((0, Kp - K), (0, Np - Nc)))
    bias_p = jnp.pad(bias.astype(jnp.float32), (0, Np - Nc)).reshape(1, Np)
    alpha1 = jnp.asarray(alpha, jnp.float32).reshape(1)

    out = pl.pallas_call(
        functools.partial(_mm_bias_prelu_kernel, tk=tk, rem_k=rem_k),
        out_shape=jax.ShapeDtypeStruct((M, Np), jnp.float32),
        grid_spec=pltpu.PrefetchScalarGridSpec(
            num_scalar_prefetch=0,
            grid=(pl.cdiv(M, tm), Np // tn, Kp // tk),
            in_specs=[
                pl.BlockSpec((tm, tk), lambda i, j, k: (i, k)),
                pl.BlockSpec((tk, tn), lambda i, j, k: (k, j)),
                pl.BlockSpec((1, tn), lambda i, j, k: (0, j)),
                pl.BlockSpec(memory_space=pltpu.MemorySpace.SMEM),
            ],
            out_specs=pl.BlockSpec((tm, tn), lambda i, j, k: (i, j)),
        ),
        compiler_params=pltpu.CompilerParams(
            dimension_semantics=("parallel", "parallel", "arbitrary"),
            vmem_limit_bytes=_VMEM_LIMIT_BYTES,
        ),
    )(a.astype(jnp.float32), b_p.astype(jnp.float32), bias_p, alpha1)
    return out if Np == Nc else out[:, :Nc]


# ---------------------------------------------------------------------------
# GCN module-equivalent wrapper
# ---------------------------------------------------------------------------
def gcn_forward(seq, adj, weight, bias, alpha, *, force_two_stage=False):
    """GCN forward: PReLU(adj @ (seq @ W^T) + bias).

    weight: [out_ft, in_ft] (PyTorch nn.Linear layout).
    adj may be f32 or bf16 (bf16 halves the dominant N^2 HBM read; the matmul
    still accumulates in f32 and the epilogue is f32).
    """
    seq = seq.astype(jnp.float32)
    weight = weight.astype(jnp.float32)
    bias = bias.astype(jnp.float32)
    if adj.dtype not in (jnp.bfloat16, jnp.float32):
        adj = adj.astype(jnp.float32)

    N, in_ft = seq.shape
    out_ft = weight.shape[0]
    in_p = _round_up(in_ft, 128)
    out_p = _round_up(out_ft, 128)

    # One-time tiny prep: weight transposed so the kernel epilogue is a plain
    # (1,0)-contraction (no per-row-tile relayout of W through the XLU).
    w_t = weight.T                                     # [in_ft, out_ft]
    alpha1 = jnp.asarray(alpha, jnp.float32).reshape(1)

    # ---- tile heuristic ---------------------------------------------------
    if N >= 2048:
        tm = 512
    elif N >= 512:
        tm = 256
    else:
        tm = _round_up(max(N, 8), 8)
    # Give the parallel row axis >= 2 steps so a dual-TensorCore chip (v7x)
    # can split it; costs one extra ~0.35us grid step on single-core chips.
    if N > 16 and pl.cdiv(N, tm) < 2:
        tm = _round_up(pl.cdiv(N, 2), 8)
    tk = min(_round_up(N, 128), 1024)
    Kp = pl.cdiv(N, tk) * tk

    stream_bytes = jnp.dtype(adj.dtype).itemsize
    fused_ok = (
        in_ft <= out_ft
        and _fused_vmem_bytes(tm, tk, Kp, in_p, out_p, stream_bytes)
        <= _FUSED_VMEM_BUDGET)

    if fused_ok and not force_two_stage:
        w_t_p = w_t if w_t.shape == (in_p, out_p) else jnp.pad(
            w_t, ((0, in_p - in_ft), (0, out_p - out_ft)))
        bias_p = jnp.pad(bias, (0, out_p - out_ft)).reshape(1, out_p)
        return _gcn_fused(adj, seq.astype(adj.dtype), w_t_p, bias_p, alpha1,
                          tm=tm, tk=tk, out_ft=out_ft)

    # ---- two-stage fallback (intermediate round-trips HBM), FLOP-optimal ---
    adj32 = adj.astype(jnp.float32)
    one = jnp.float32(1.0)
    if in_ft <= out_ft:
        h = _matmul_bias_prelu(adj32, seq, jnp.zeros((in_ft,), jnp.float32), one)
        return _matmul_bias_prelu(h, w_t, bias, alpha1)
    else:
        h = _matmul_bias_prelu(seq, w_t, jnp.zeros((out_ft,), jnp.float32), one)
        return _matmul_bias_prelu(adj32, h, bias, alpha1)


def gcn_reference(seq, adj, weight, bias, alpha):
    h = seq @ weight.T
    out = adj @ h + bias
    return jnp.where(out >= 0.0, out, alpha * out)


def _xavier_uniform(key, out_ft, in_ft):
    bound = math.sqrt(6.0 / (in_ft + out_ft))
    return jax.random.uniform(key, (out_ft, in_ft), jnp.float32, -bound, bound)


if __name__ == "__main__":
    key = jax.random.PRNGKey(0)

    # Case 1: tile-friendly sizes, module-default params (bias=0, alpha=0.25),
    #         fused single-kernel path.
    N, IN_FT, OUT_FT = 128, 64, 128
    k1, k2, k3, key = jax.random.split(key, 4)
    seq = jax.random.normal(k1, (N, IN_FT), jnp.float32)
    adj_raw = jax.random.uniform(k2, (N, N), jnp.float32)
    adj = adj_raw / jnp.sum(adj_raw, axis=1, keepdims=True)
    weight = _xavier_uniform(k3, OUT_FT, IN_FT)
    bias = jnp.zeros((OUT_FT,), jnp.float32)
    alpha = jnp.float32(0.25)

    out = jax.block_until_ready(gcn_forward(seq, adj, weight, bias, alpha))
    ref = gcn_reference(seq, adj, weight, bias, alpha)
    assert out.shape == (N, OUT_FT)
    assert jnp.allclose(out, ref, atol=2e-4, rtol=2e-4), "fused path mismatch"

    # Case 2: ragged (non-tile-multiple) shapes + nonzero bias/alpha; exercises
    #         the in-kernel ragged-tail masking and lane-padded output slice.
    N2, IN2, OUT2 = 100, 48, 80
    k1, k2, k3, k4, key = jax.random.split(key, 5)
    seq2 = jax.random.normal(k1, (N2, IN2), jnp.float32)
    adj2_raw = jax.random.uniform(k2, (N2, N2), jnp.float32)
    adj2 = adj2_raw / jnp.sum(adj2_raw, axis=1, keepdims=True)
    w2 = _xavier_uniform(k3, OUT2, IN2)
    b2 = 0.1 * jax.random.normal(k4, (OUT2,), jnp.float32)
    a2 = jnp.float32(0.1)

    out2 = jax.block_until_ready(gcn_forward(seq2, adj2, w2, b2, a2))
    ref2 = gcn_reference(seq2, adj2, w2, b2, a2)
    assert out2.shape == (N2, OUT2)
    assert jnp.allclose(out2, ref2, atol=2e-4, rtol=2e-4), "ragged path mismatch"

    # Case 3: forced two-stage fallback kernels (large-feature-dim path).
    out3 = jax.block_until_ready(
        gcn_forward(seq, adj, weight, bias, alpha, force_two_stage=True))
    assert jnp.allclose(out3, ref, atol=2e-4, rtol=2e-4), "two-stage mismatch"

    # Case 4: in_ft > out_ft (seq @ W^T first), two-stage FLOP-optimal order.
    N4, IN4, OUT4 = 120, 96, 32
    k1, k2, k3, k4, key = jax.random.split(key, 5)
    seq4 = jax.random.normal(k1, (N4, IN4), jnp.float32)
    adj4_raw = jax.random.uniform(k2, (N4, N4), jnp.float32)
    adj4 = adj4_raw / jnp.sum(adj4_raw, axis=1, keepdims=True)
    w4 = _xavier_uniform(k3, OUT4, IN4)
    b4 = 0.05 * jax.random.normal(k4, (OUT4,), jnp.float32)
    out4 = jax.block_until_ready(gcn_forward(seq4, adj4, w4, b4, jnp.float32(0.2)))
    ref4 = gcn_reference(seq4, adj4, w4, b4, jnp.float32(0.2))
    assert out4.shape == (N4, OUT4)
    assert jnp.allclose(out4, ref4, atol=2e-4, rtol=2e-4), "in>out path mismatch"

    # Case 5: bf16-stored adjacency (halves the dominant HBM read), f32 accum.
    out5 = jax.block_until_ready(
        gcn_forward(seq, adj.astype(jnp.bfloat16), weight, bias, alpha))
    assert jnp.allclose(out5, ref, atol=1e-2, rtol=1e-2), "bf16-adj mismatch"

    print("KERNEL_OK")
</pallas_src>

<mosaic_0001>
module attributes {stable_mosaic.version = 11 : i64} {
  func.func @_gcn_fused_kernel(%arg0: i32, %arg1: i32, %arg2: memref<64x128xf32, #tpu.memory_space<vmem>>, %arg3: memref<128x128xf32, #tpu.memory_space<vmem>>, %arg4: memref<128x128xf32, #tpu.memory_space<vmem>>, %arg5: memref<1x128xf32, #tpu.memory_space<vmem>>, %arg6: memref<1xf32, #tpu.memory_space<smem>>, %arg7: memref<64x128xf32, #tpu.memory_space<vmem>>, %arg8: memref<64x128xf32, #tpu.memory_space<vmem>>) attributes {dimension_semantics = [#tpu.dimension_semantics<parallel>, #tpu.dimension_semantics<arbitrary>], iteration_bounds = array<i64: 2, 1>, scalar_prefetch = 0 : i64, scratch_operands = 1 : i64, tpu.core_type = #tpu.core_type<tc>, window_params = [{transform_indices = @transform_0, window_bounds = array<i64: 64, 128>}, {pipeline_mode = #tpu.pipeline_mode<synchronous>, transform_indices = @transform_1, window_bounds = array<i64: 128, 128>}, {pipeline_mode = #tpu.pipeline_mode<synchronous>, transform_indices = @transform_2, window_bounds = array<i64: 128, 128>}, {pipeline_mode = #tpu.pipeline_mode<synchronous>, transform_indices = @transform_3, window_bounds = array<i64: 1, 128>}, {transform_indices = @transform_4, window_bounds = array<i64: 1>}, {transform_indices = @transform_5, window_bounds = array<i64: 64, 128>}]} {
    %c0_i32 = arith.constant 0 : i32
    %0 = arith.cmpi eq, %arg1, %c0_i32 : i32
    %1 = arith.extui %0 : i1 to i32
    %c0_i32_0 = arith.constant 0 : i32
    %2 = arith.cmpi ne, %1, %c0_i32_0 : i32
    scf.if %2 {
      %cst_9 = arith.constant 0.000000e+00 : f32
      %15 = vector.broadcast %cst_9 : f32 to vector<64x128xf32>
      %c0_10 = arith.constant 0 : index
      %c0_11 = arith.constant 0 : index
      %16 = vector.load %arg8[%c0_10, %c0_11] : memref<64x128xf32, #tpu.memory_space<vmem>>, vector<64x128xf32>
      tpu.vector_store %arg8[%c0_10, %c0_11], %15 {strides = array<i32>} : memref<64x128xf32, #tpu.memory_space<vmem>>, vector<64x128xf32>,
    } else {
    }
    %c0 = arith.constant 0 : index
    %c0_1 = arith.constant 0 : index
    %3 = vector.load %arg2[%c0, %c0_1] : memref<64x128xf32, #tpu.memory_space<vmem>>, vector<64x128xf32>
    %c128_i32 = arith.constant 128 : i32
    %4 = arith.muli %arg1, %c128_i32 : i32
    %5 = tpu.assume_multiple %4, 128 : i32
    %6 = arith.index_cast %5 : i32 to index
    %c0_2 = arith.constant 0 : index
    %7 = vector.load %arg3[%6, %c0_2] : memref<128x128xf32, #tpu.memory_space<vmem>>, vector<128x128xf32>
    %c0_3 = arith.constant 0 : index
    %c0_4 = arith.constant 0 : index
    %8 = vector.load %arg8[%c0_3, %c0_4] : memref<64x128xf32, #tpu.memory_space<vmem>>, vector<64x128xf32>
    %cst = arith.constant dense<0.000000e+00> : vector<64x128xf32>
    %9 = tpu.matmul %3, %7, %cst {dimension_numbers = #tpu.dot_dimension_numbers<[1], [0], [0], [1], [0, 0, 1, 1], [], []>} : vector<64x128xf32>, vector<128x128xf32>, vector<64x128xf32> -> vector<64x128xf32>
    %10 = arith.addf %8, %9 : vector<64x128xf32>
    %c0_5 = arith.constant 0 : index
    %c0_6 = arith.constant 0 : index
    %11 = vector.load %arg8[%c0_5, %c0_6] : memref<64x128xf32, #tpu.memory_space<vmem>>, vector<64x128xf32>
    tpu.vector_store %arg8[%c0_5, %c0_6], %10 {strides = array<i32>} : memref<64x128xf32, #tpu.memory_space<vmem>>, vector<64x128xf32>,
    %c0_i32_7 = arith.constant 0 : i32
    %12 = arith.cmpi eq, %arg1, %c0_i32_7 : i32
    %13 = arith.extui %12 : i1 to i32
    %c0_i32_8 = arith.constant 0 : i32
    %14 = arith.cmpi ne, %13, %c0_i32_8 : i32
    scf.if %14 {
      %c0_9 = arith.constant 0 : index
      %c0_10 = arith.constant 0 : index
      %15 = vector.load %arg8[%c0_9, %c0_10] : memref<64x128xf32, #tpu.memory_space<vmem>>, vector<64x128xf32>
      %c0_11 = arith.constant 0 : index
      %c0_12 = arith.constant 0 : index
      %16 = vector.load %arg4[%c0_11, %c0_12] : memref<128x128xf32, #tpu.memory_space<vmem>>, vector<128x128xf32>
      %cst_13 = arith.constant dense<0.000000e+00> : vector<64x128xf32>
      %17 = tpu.matmul %15, %16, %cst_13 {dimension_numbers = #tpu.dot_dimension_numbers<[1], [0], [0], [1], [0, 0, 1, 1], [], []>} : vector<64x128xf32>, vector<128x128xf32>, vector<64x128xf32> -> vector<64x128xf32>
      %c0_14 = arith.constant 0 : index
      %c0_15 = arith.constant 0 : index
      %18 = vector.load %arg5[%c0_14, %c0_15] : memref<1x128xf32, #tpu.memory_space<vmem>>, vector<1x128xf32>
      %19 = vector.broadcast %18 : vector<1x128xf32> to vector<64x128xf32>
      %20 = arith.addf %17, %19 : vector<64x128xf32>
      %c0_16 = arith.constant 0 : index
      %21 = memref.load %arg6[%c0_16] : memref<1xf32, #tpu.memory_space<smem>>
      %cst_17 = arith.constant 0.000000e+00 : f32
      %22 = vector.broadcast %cst_17 : f32 to vector<64x128xf32>
      %23 = arith.cmpf oge, %20, %22 : vector<64x128xf32>
      %24 = vector.broadcast %21 : f32 to vector<64x128xf32>
      %25 = arith.mulf %24, %20 : vector<64x128xf32>
      %26 = arith.select %23, %20, %25 : vector<64x128xi1>, vector<64x128xf32>
      %c0_18 = arith.constant 0 : index
      %c0_19 = arith.constant 0 : index
      %27 = vector.load %arg7[%c0_18, %c0_19] : memref<64x128xf32, #tpu.memory_space<vmem>>, vector<64x128xf32>
      tpu.vector_store %arg7[%c0_18, %c0_19], %26 {strides = array<i32>} : memref<64x128xf32, #tpu.memory_space<vmem>>, vector<64x128xf32>,
    } else {
    }
    return
  }
  func.func @transform_0(%arg0: i32, %arg1: i32) -> (i32, i32) {
    %c0_i32 = arith.constant 0 : i32
    return %arg0, %arg1 : i32, i32
  }
  func.func @transform_1(%arg0: i32, %arg1: i32) -> (i32, i32) {
    %c0_i32 = arith.constant 0 : i32
    %c0_i32_0 = arith.constant 0 : i32
    %c0_i32_1 = arith.constant 0 : i32
    return %c0_i32, %c0_i32_0 : i32, i32
  }
  func.func @transform_2(%arg0: i32, %arg1: i32) -> (i32, i32) {
    %c0_i32 = arith.constant 0 : i32
    %c0_i32_0 = arith.constant 0 : i32
    %c0_i32_1 = arith.constant 0 : i32
    return %c0_i32, %c0_i32_0 : i32, i32
  }
  func.func @transform_3(%arg0: i32, %arg1: i32) -> (i32, i32) {
    %c0_i32 = arith.constant 0 : i32
    %c0_i32_0 = arith.constant 0 : i32
    %c0_i32_1 = arith.constant 0 : i32
    return %c0_i32, %c0_i32_0 : i32, i32
  }
  func.func @transform_4(%arg0: i32, %arg1: i32) -> i32 {
    %c0_i32 = arith.constant 0 : i32
    %c0_i32_0 = arith.constant 0 : i32
    return %c0_i32 : i32
  }
  func.func @transform_5(%arg0: i32, %arg1: i32) -> (i32, i32) {
    %c0_i32 = arith.constant 0 : i32
    %c0_i32_0 = arith.constant 0 : i32
    return %arg0, %c0_i32 : i32, i32
  }
}

</mosaic_0001>

<llo_original>
// kernel: tpu_custom_call.1
$region0: #{tpu_custom_call.1}
  #allocation0 [shape = 'u32[]', space=smem, size = 0x4, offset = 0x4, fixed_abs, tag = 'smem constant byte address 0x4 - core index']
  #allocation1 [shape = 'u32[144,128]{1,0:T(1,128)}', space=vmem, size = 0x12000, scoped, tag = 'internal scratch']
  #allocation2 [shape = 'f32[64,128]{1,0:T(8,128)}', space=vmem, size = 0x8000, scoped, tag = 'scratch operand']
  #allocation3 [shape = 'f32[1]{0:T(128)S(6)}', space=smem, size = 0x200, scoped, tag = 'scoped memory for tpu_custom_call.1']
  %s0 = inlined_call_operand.hbm [shape: f32[128,128], index: 0, kind: input, shape index: {}]
  %s1 = inlined_call_operand.hbm [shape: f32[128,128], index: 1, kind: input, shape index: {}]
  %s2 = inlined_call_operand.hbm [shape: f32[128,128], index: 2, kind: input, shape index: {}]
  %s3 = inlined_call_operand.vmem [shape: f32[1,128], index: 3, kind: input, shape index: {}]
  %s4 = inlined_call_operand.<no memory space> [shape: f32[1], index: 4, kind: input, shape index: {}]
  %s5 = inlined_call_operand.hbm [shape: f32[128,128], index: 5, kind: output, shape index: {}]
  %s6 = sld [smem:[#allocation0]]
  $region73: #{tpu_custom_call.1} parent=0
    _
  %s8 = ssub.s32 1, %s6
  %s9 = scalar_select 0, %s8, %s6
  %10 = sst [smem:[#allocation3]] %s4
  $region1: #{tpu_custom_call.1} parent=0
    #allocation4 [shape = 'u8[65536]{0}', space=vmem, size = 0x10000, scoped, tag = 'input window, operand 0']
    #allocation5 [shape = 's32[2]{0}', space=sflag, size = 0x8, scoped, tag = 'scoped memory for tpu_custom_call.1']
    #allocation6 [shape = 's32[2]{0}', space=sflag, size = 0x8, scoped, tag = 'scoped memory for tpu_custom_call.1']
    #allocation7 [shape = 'u8[65536]{0}', space=vmem, size = 0x10000, scoped, tag = 'input window, operand 1, single buffered']
    #allocation8 [shape = 's32[1]{0}', space=sflag, size = 0x4, scoped, tag = 'scoped memory for tpu_custom_call.1']
    #allocation9 [shape = 'u8[65536]{0}', space=vmem, size = 0x10000, scoped, tag = 'input window, operand 2, single buffered']
    #allocation10 [shape = 'u8[65536]{0}', space=vmem, size = 0x10000, scoped, tag = 'output window, operand 0']
    %11 = vsyncpa [#allocation5], 0
    %s12 = scalar_lea.sflag [#allocation5], 1
    %13 = vsyncpa %s12, 0
    %14 = vsyncpa [#allocation8], 0
    %15 = vsyncpa [#allocation6], 0
    %s16 = scalar_lea.sflag [#allocation6], 1
    %17 = vsyncpa %s16, 0
    loop: start=0, step=1, limit=4
    $region2: #{tpu_custom_call.1} parent=1 // loop_pre_header
      _
    $region3: #{tpu_custom_call.1} parent=1 // loop_header
      %s19 = sphi 0, %s23
      %p20 = scmp.ge.s32.totalorder %s19, 4
      %s26 = sphi 0, %s38
      %s27 = sphi 0, %s34
      %s28 = sphi 0, %s26
      %s29 = sphi 0, %s27
      %s30 = sphi 0, %s28
      %s31 = sphi 0, %s29
      %s43 = sphi 0, %s45
      %s46 = sphi 0, %s43
      %s47 = sphi 0, %s46
      %s63 = sphi 0, %s47
      %s67 = sphi 0, %s67
      %s69 = sphi 0, %s67
      %s70 = sphi 0, %s69
      %s84 = sphi 0, %s70
      %s88 = sphi 0, %s88
      %s90 = sphi 0, %s88
      %s91 = sphi 0, %s90
      %s105 = sphi 0, %s91
      %s109 = sphi 0, %s109
      %s111 = sphi 0, %s109
      %s112 = sphi 0, %s111
      %s126 = sphi 0, %s112
      %s130 = sphi 0, %s130
      %s132 = sphi 0, %s130
      %s133 = sphi 0, %s132
      %s147 = sphi 0, %s133
      %s153 = sphi 0, %s155
      %s156 = sphi 0, %s153
      %s157 = sphi 0, %s156
      %s173 = sphi 0, %s157
    $region4: #{tpu_custom_call.1} parent=1 // loop_header_branch
      %22 = sbr.rel (%p20) target = $region8
    $region5: #{tpu_custom_call.1} parent=1 // loop_body
      %s24 = ssub.s32 %s19, 1
      %s25 = ssub.s32 %s19, 2
      %s32 = sadd.s32 1, %s27
      %p33 = scmp.ge.s32.totalorder %s32, 1
      %s34 = scalar_select %p33, 0, %s32
      %s35 = sadd.s32 1, %s26
      %s36 = scalar_select %p33, %s35, %s26
      %p37 = scmp.ge.s32.totalorder %s36, 2
      %s38 = scalar_select %p37, 0, %s36
      %s39 = ssub.s32 %s26, %s38
      %s40 = ssub.s32 %s27, %s34
      %s41 = sor.u32 %s39, %s40
      %p42 = scmp.eq.s32.totalorder %s41, 0
      %s44 = sadd.s32 %s43, 1
      %s45 = scalar_select %p42, %s43, %s44
      %p48 = pneg %p42
      %p49 = scmp.eq.s32.totalorder %s19, 1
      %p50 = por %p48, %p49
      %p51 = scmp.ne.s32.totalorder %s43, %s46
      %p52 = scmp.eq.s32.totalorder %s19, 0
      %p53 = por %p51, %p52
      %p54 = scmp.ne.s32.totalorder %s43, %s46
      %p55 = scmp.eq.s32.totalorder %s24, 1
      %p56 = por %p54, %p55
      %p57 = scmp.ne.s32.totalorder %s46, %s47
      %p58 = scmp.eq.s32.totalorder %s24, 0
      %p59 = por %p57, %p58
      %p60 = scmp.ne.s32.totalorder %s46, %s47
      %p61 = scmp.eq.s32.totalorder %s25, 1
      %p62 = por %p60, %p61
      %p64 = scmp.ne.s32.totalorder %s47, %s63
      %p65 = scmp.eq.s32.totalorder %s25, 0
      %p66 = por %p64, %p65
      %s68 = sadd.s32 %s67, 1
      %p71 = scmp.eq.s32.totalorder %s19, 1
      %p72 = scmp.ne.s32.totalorder %s67, %s69
      %p73 = scmp.eq.s32.totalorder %s19, 0
      %p74 = por %p72, %p73
      %p75 = scmp.ne.s32.totalorder %s67, %s69
      %p76 = scmp.eq.s32.totalorder %s24, 1
      %p77 = por %p75, %p76
      %p78 = scmp.ne.s32.totalorder %s69, %s70
      %p79 = scmp.eq.s32.totalorder %s24, 0
      %p80 = por %p78, %p79
      %p81 = scmp.ne.s32.totalorder %s69, %s70
      %p82 = scmp.eq.s32.totalorder %s25, 1
      %p83 = por %p81, %p82
      %p85 = scmp.ne.s32.totalorder %s70, %s84
      %p86 = scmp.eq.s32.totalorder %s25, 0
      %p87 = por %p85, %p86
      %s89 = sadd.s32 %s88, 1
      %p92 = scmp.eq.s32.totalorder %s19, 1
      %p93 = scmp.ne.s32.totalorder %s88, %s90
      %p94 = scmp.eq.s32.totalorder %s19, 0
      %p95 = por %p93, %p94
      %p96 = scmp.ne.s32.totalorder %s88, %s90
      %p97 = scmp.eq.s32.totalorder %s24, 1
      %p98 = por %p96, %p97
      %p99 = scmp.ne.s32.totalorder %s90, %s91
      %p100 = scmp.eq.s32.totalorder %s24, 0
      %p101 = por %p99, %p100
      %p102 = scmp.ne.s32.totalorder %s90, %s91
      %p103 = scmp.eq.s32.totalorder %s25, 1
      %p104 = por %p102, %p103
      %p106 = scmp.ne.s32.totalorder %s91, %s105
      %p107 = scmp.eq.s32.totalorder %s25, 0
      %p108 = por %p106, %p107
      %s110 = sadd.s32 %s109, 1
      %p113 = scmp.eq.s32.totalorder %s19, 1
      %p114 = scmp.ne.s32.totalorder %s109, %s111
      %p115 = scmp.eq.s32.totalorder %s19, 0
      %p116 = por %p114, %p115
      %p117 = scmp.ne.s32.totalorder %s109, %s111
      %p118 = scmp.eq.s32.totalorder %s24, 1
      %p119 = por %p117, %p118
      %p120 = scmp.ne.s32.totalorder %s111, %s112
      %p121 = scmp.eq.s32.totalorder %s24, 0
      %p122 = por %p120, %p121
      %p123 = scmp.ne.s32.totalorder %s111, %s112
      %p124 = scmp.eq.s32.totalorder %s25, 1
      %p125 = por %p123, %p124
      %p127 = scmp.ne.s32.totalorder %s112, %s126
      %p128 = scmp.eq.s32.totalorder %s25, 0
      %p129 = por %p127, %p128
      %s131 = sadd.s32 %s130, 1
      %p134 = scmp.eq.s32.totalorder %s19, 1
      %p135 = scmp.ne.s32.totalorder %s130, %s132
      %p136 = scmp.eq.s32.totalorder %s19, 0
      %p137 = por %p135, %p136
      %p138 = scmp.ne.s32.totalorder %s130, %s132
      %p139 = scmp.eq.s32.totalorder %s24, 1
      %p140 = por %p138, %p139
      %p141 = scmp.ne.s32.totalorder %s132, %s133
      %p142 = scmp.eq.s32.totalorder %s24, 0
      %p143 = por %p141, %p142
      %p144 = scmp.ne.s32.totalorder %s132, %s133
      %p145 = scmp.eq.s32.totalorder %s25, 1
      %p146 = por %p144, %p145
      %p148 = scmp.ne.s32.totalorder %s133, %s147
      %p149 = scmp.eq.s32.totalorder %s25, 0
      %p150 = por %p148, %p149
      %s151 = ssub.s32 %s26, %s38
      %p152 = scmp.eq.s32.totalorder %s151, 0
      %s154 = sadd.s32 %s153, 1
      %s155 = scalar_select %p152, %s153, %s154
      %p158 = pneg %p152
      %p159 = scmp.eq.s32.totalorder %s19, 1
      %p160 = por %p158, %p159
      %p161 = scmp.ne.s32.totalorder %s153, %s156
      %p162 = scmp.eq.s32.totalorder %s19, 0
      %p163 = por %p161, %p162
      %p164 = scmp.ne.s32.totalorder %s153, %s156
      %p165 = scmp.eq.s32.totalorder %s24, 1
      %p166 = por %p164, %p165
      %p167 = scmp.ne.s32.totalorder %s156, %s157
      %p168 = scmp.eq.s32.totalorder %s24, 0
      %p169 = por %p167, %p168
      %p170 = scmp.ne.s32.totalorder %s156, %s157
      %p171 = scmp.eq.s32.totalorder %s25, 1
      %p172 = por %p170, %p171
      %p174 = scmp.ne.s32.totalorder %s157, %s173
      %p175 = scmp.eq.s32.totalorder %s25, 0
      %p176 = por %p174, %p175
      %p177 = scmp.le.s32.totalorder 1, %s19
      %p178 = scmp.lt.s32.totalorder %s19, 3
      %p179 = pnand %p177, %p178
      %p180 = pneg %p179
      // Predicated region
      $region9: #{tpu_custom_call.1} parent=5 // pred_check
        _
      $region10: #{tpu_custom_call.1} parent=5 // pred_check_branch
        %182 = sbr.rel (%p179) target = $region12
      $region11: #{tpu_custom_call.1} parent=5 // pred_region
        %s183 = ssub.s32 %s19, 1
        // Predicated region
        $region13: #{tpu_custom_call.1} parent=11 // pred_check
          %p184 = pneg %p80
        $region14: #{tpu_custom_call.1} parent=11 // pred_check_branch
          %186 = sbr.rel (%p184) target = $region16
        $region15: #{tpu_custom_call.1} parent=11 // pred_region
          %s188 = ssub.s32 2048, 2048
          %189 = vsyncadd [#allocation8], %s188
          %s190 = sshll.u32 [#allocation7], 4
          %s191 = int_to_ptr.vmem [resolvable:$true] %s190
          %196 = dma.hbm_to_vmem [thread:$0]  %s1, 2048, %s191, [#allocation8], 128, 128, 8
        $region16: #{tpu_custom_call.1} parent=11 // pred_fallthru
          _
        // Predicated region
        $region17: #{tpu_custom_call.1} parent=11 // pred_check
          %p197 = pneg %p101
        $region18: #{tpu_custom_call.1} parent=11 // pred_check_branch
          %199 = sbr.rel (%p197) target = $region20
        $region19: #{tpu_custom_call.1} parent=11 // pred_region
          %s201 = ssub.s32 2048, 2048
          %202 = vsyncadd [#allocation8], %s201
          %s203 = sshll.u32 [#allocation9], 4
          %s204 = int_to_ptr.vmem [resolvable:$true] %s203
          %209 = dma.hbm_to_vmem [thread:$0]  %s2, 2048, %s204, [#allocation8], 128, 128, 8
        $region20: #{tpu_custom_call.1} parent=11 // pred_fallthru
          _
        // Predicated region
        $region21: #{tpu_custom_call.1} parent=11 // pred_check
          %p210 = pneg %p122
        $region22: #{tpu_custom_call.1} parent=11 // pred_check_branch
          %212 = sbr.rel (%p210) target = $region24
        $region23: #{tpu_custom_call.1} parent=11 // pred_region
          _
        $region24: #{tpu_custom_call.1} parent=11 // pred_fallthru
          _
        // Predicated region
        $region25: #{tpu_custom_call.1} parent=11 // pred_check
          %p213 = pneg %p143
        $region26: #{tpu_custom_call.1} parent=11 // pred_check_branch
          %215 = sbr.rel (%p213) target = $region28
        $region27: #{tpu_custom_call.1} parent=11 // pred_region
          _
        $region28: #{tpu_custom_call.1} parent=11 // pred_fallthru
          _
      $region12: #{tpu_custom_call.1} parent=5 // pred_fallthru
        _
      %p216 = scmp.lt.s32.totalorder %s19, 2
      // Predicated region
      $region29: #{tpu_custom_call.1} parent=5 // pred_check
        %p217 = pneg %p216
      $region30: #{tpu_custom_call.1} parent=5 // pred_check_branch
        %219 = sbr.rel (%p217) target = $region32
      $region31: #{tpu_custom_call.1} parent=5 // pred_region
        // Predicated region
        $region33: #{tpu_custom_call.1} parent=31 // pred_check
          %p220 = pneg %p53
        $region34: #{tpu_custom_call.1} parent=31 // pred_check_branch
          %222 = sbr.rel (%p220) target = $region36
        $region35: #{tpu_custom_call.1} parent=31 // pred_region
          %s223 = sand.u32 %s43, 1
          %s224 = scalar_lea.sflag [#allocation5], %s223
          %s225 = sand.u32 %s43, 1
          %s226 = smul.addr %s225, 64
          %s227 = scalar_lea.vmem [#allocation4], %s226
          %s228 = smul.u32 8, %s26
          %s230 = ssub.s32 1024, 1024
          %231 = vsyncadd %s224, %s230
          %s232 = sadd.s32 %s27, %s228
          %s233 = smul.addr %s232, 128
          %s234 = scalar_lea.hbm %s0, %s233
          %s235 = sshll.u32 %s227, 4
          %s236 = int_to_ptr.vmem [resolvable:$true] %s235
          %241 = dma.hbm_to_vmem [thread:$0]  %s234, 1024, %s236, %s224, 128, 128, 8
        $region36: #{tpu_custom_call.1} parent=31 // pred_fallthru
          _
      $region32: #{tpu_custom_call.1} parent=5 // pred_fallthru
        _
      %p242 = scmp.le.s32.totalorder 1, %s19
      %p243 = scmp.lt.s32.totalorder %s19, 3
      %p244 = pnand %p242, %p243
      %p245 = pneg %p244
      // Predicated region
      $region37: #{tpu_custom_call.1} parent=5 // pred_check
        _
      $region38: #{tpu_custom_call.1} parent=5 // pred_check_branch
        %247 = sbr.rel (%p244) target = $region40
      $region39: #{tpu_custom_call.1} parent=5 // pred_region
        %s248 = ssub.s32 %s19, 1
        %s249 = sand.u32 %s46, 1
        %s250 = scalar_lea.sflag [#allocation5], %s249
        %s251 = sand.u32 %s46, 1
        %s252 = smul.addr %s251, 64
        %s253 = scalar_lea.vmem [#allocation4], %s252
        // Predicated region
        $region41: #{tpu_custom_call.1} parent=39 // pred_check
          %p254 = pneg %p59
        $region42: #{tpu_custom_call.1} parent=39 // pred_check_branch
          %256 = sbr.rel (%p254) target = $region44
        $region43: #{tpu_custom_call.1} parent=39 // pred_region
          %257 = dma.done %s250, 1024
        $region44: #{tpu_custom_call.1} parent=39 // pred_fallthru
          _
        // Predicated region
        $region45: #{tpu_custom_call.1} parent=39 // pred_check
          %p258 = pneg %p80
        $region46: #{tpu_custom_call.1} parent=39 // pred_check_branch
          %260 = sbr.rel (%p258) target = $region48
        $region47: #{tpu_custom_call.1} parent=39 // pred_region
          %261 = dma.done [#allocation8], 2048
        $region48: #{tpu_custom_call.1} parent=39 // pred_fallthru
          _
        // Predicated region
        $region49: #{tpu_custom_call.1} parent=39 // pred_check
          %p262 = pneg %p101
        $region50: #{tpu_custom_call.1} parent=39 // pred_check_branch
          %264 = sbr.rel (%p262) target = $region52
        $region51: #{tpu_custom_call.1} parent=39 // pred_region
          %265 = dma.done [#allocation8], 2048
        $region52: #{tpu_custom_call.1} parent=39 // pred_fallthru
          _
        %s266 = sand.u32 %s46, 1
        %s267 = scalar_lea.sflag [#allocation5], %s266
        %s268 = sand.u32 %s46, 1
        %s269 = smul.addr %s268, 64
        %s270 = scalar_lea.vmem [#allocation4], %s269
        %p271 = pneg %p59
        %p272 = pneg %p56
        %p273 = pneg %p80
        %p274 = pneg %p77
        %p275 = pneg %p101
        %p276 = pneg %p98
        %p277 = pneg %p122
        %p278 = pneg %p119
        %p279 = pneg %p143
        %p280 = pneg %p140
        %p281 = pneg %p169
        %p282 = pneg %p166
        %s283 = sand.u32 %s156, 1
        %s284 = scalar_lea.sflag [#allocation6], %s283
        %s285 = sand.u32 %s156, 1
        %s286 = smul.addr %s285, 64
        %s287 = scalar_lea.vmem [#allocation10], %s286
        %s288 = smul.u32 8, %s28
        %s289 = smul.u32 8, %s28
        %p290 = scmp.eq.s32.totalorder %s29, 0
        // Predicated region
        $region53: #{tpu_custom_call.1} parent=39 // pred_check
          %p291 = pneg %p290
        $region54: #{tpu_custom_call.1} parent=39 // pred_check_branch
          %293 = sbr.rel (%p291) target = $region56
        $region55: #{tpu_custom_call.1} parent=39 // pred_region
          %294 = vst [vmem:[#allocation2] sm:$0xff] 0.0
          %295 = vst [vmem:[#allocation2 + $0x8] sm:$0xff] 0.0
          %296 = vst [vmem:[#allocation2 + $0x10] sm:$0xff] 0.0
          %297 = vst [vmem:[#allocation2 + $0x18] sm:$0xff] 0.0
          %298 = vst [vmem:[#allocation2 + $0x20] sm:$0xff] 0.0
          %299 = vst [vmem:[#allocation2 + $0x28] sm:$0xff] 0.0
          %300 = vst [vmem:[#allocation2 + $0x30] sm:$0xff] 0.0
          %301 = vst [vmem:[#allocation2 + $0x38] sm:$0xff] 0.0
        $region56: #{tpu_custom_call.1} parent=39 // pred_fallthru
          _
        %v302 = vld [vmem:[%s253] sm:$0xff]
        %v303 = vld [vmem:[%s253 + $0x8] sm:$0xff]
        %v304 = vld [vmem:[%s253 + $0x10] sm:$0xff]
        %v305 = vld [vmem:[%s253 + $0x18] sm:$0xff]
        %v306 = vld [vmem:[%s253 + $0x20] sm:$0xff]
        %v307 = vld [vmem:[%s253 + $0x28] sm:$0xff]
        %v308 = vld [vmem:[%s253 + $0x30] sm:$0xff]
        %v309 = vld [vmem:[%s253 + $0x38] sm:$0xff]
        %s310 = smul.u32 %s29, 128
        %s311 = scalar_lea.vmem [#allocation7], %s310
        %v312 = vld [vmem:[%s311] sm:$0xff]
        %v313 = vld [vmem:[%s311 + $0x8] sm:$0xff]
        %v314 = vld [vmem:[%s311 + $0x10] sm:$0xff]
        %v315 = vld [vmem:[%s311 + $0x18] sm:$0xff]
        %v316 = vld [vmem:[%s311 + $0x20] sm:$0xff]
        %v317 = vld [vmem:[%s311 + $0x28] sm:$0xff]
        %v318 = vld [vmem:[%s311 + $0x30] sm:$0xff]
        %v319 = vld [vmem:[%s311 + $0x38] sm:$0xff]
        %v320 = vld [vmem:[%s311 + $0x40] sm:$0xff]
        %v321 = vld [vmem:[%s311 + $0x48] sm:$0xff]
        %v322 = vld [vmem:[%s311 + $0x50] sm:$0xff]
        %v323 = vld [vmem:[%s311 + $0x58] sm:$0xff]
        %v324 = vld [vmem:[%s311 + $0x60] sm:$0xff]
        %v325 = vld [vmem:[%s311 + $0x68] sm:$0xff]
        %v326 = vld [vmem:[%s311 + $0x70] sm:$0xff]
        %v327 = vld [vmem:[%s311 + $0x78] sm:$0xff]
        %v328 = vld [vmem:[#allocation2] sm:$0xff]
        %v329 = vld [vmem:[#allocation2 + $0x8] sm:$0xff]
        %v330 = vld [vmem:[#allocation2 + $0x10] sm:$0xff]
        %v331 = vld [vmem:[#allocation2 + $0x18] sm:$0xff]
        %v332 = vld [vmem:[#allocation2 + $0x20] sm:$0xff]
        %v333 = vld [vmem:[#allocation2 + $0x28] sm:$0xff]
        %v334 = vld [vmem:[#allocation2 + $0x30] sm:$0xff]
        %v335 = vld [vmem:[#allocation2 + $0x38] sm:$0xff]
        %336 = vmatprep.subr.mxu0 0.0
        %337 = vmatpush1.msra.mxu0 %v327
        %338 = vmatprep.subr.mxu0 0.0
        %339 = vmatpush1.msra.mxu0 %v326
        %340 = vmatprep.subr.mxu0 0.0
        %341 = vmatpush1.msra.mxu0 %v325
        %342 = vmatprep.subr.mxu0 0.0
        %343 = vmatpush1.msra.mxu0 %v324
        %344 = vmatprep.subr.mxu0 0.0
        %345 = vmatpush1.msra.mxu0 %v323
        %346 = vmatprep.subr.mxu0 0.0
        %347 = vmatpush1.msra.mxu0 %v322
        %348 = vmatprep.subr.mxu0 0.0
        %349 = vmatpush1.msra.mxu0 %v321
        %350 = vmatprep.subr.mxu0 0.0
        %351 = vmatpush1.msra.mxu0 %v320
        %352 = vmatprep.subr.mxu0 0.0
        %353 = vmatpush1.msra.mxu0 %v319
        %354 = vmatprep.subr.mxu0 0.0
        %355 = vmatpush1.msra.mxu0 %v318
        %356 = vmatprep.subr.mxu0 0.0
        %357 = vmatpush1.msra.mxu0 %v317
        %358 = vmatprep.subr.mxu0 0.0
        %359 = vmatpush1.msra.mxu0 %v316
        %360 = vmatprep.subr.mxu0 0.0
        %361 = vmatpush1.msra.mxu0 %v315
        %362 = vmatprep.subr.mxu0 0.0
        %363 = vmatpush1.msra.mxu0 %v314
        %364 = vmatprep.subr.mxu0 0.0
        %365 = vmatpush1.msra.mxu0 %v313
        %366 = vmatprep.subr.mxu0 0.0
        %367 = vmatpush1.msra.mxu0 %v312
        %368 = vmatprep.subr.mxu0 0.0
        %369 = vmatpush2.msra.mxu0 0.0
        %370 = vmatprep.subr.mxu0 0.0
        %371 = vmatpush2.msra.mxu0 0.0
        %372 = vmatprep.subr.mxu0 0.0
        %373 = vmatpush2.msra.mxu0 0.0
        %374 = vmatprep.subr.mxu0 0.0
        %375 = vmatpush2.msra.mxu0 0.0
        %376 = vmatprep.subr.mxu0 0.0
        %377 = vmatpush2.msra.mxu0 0.0
        %378 = vmatprep.subr.mxu0 0.0
        %379 = vmatpush2.msra.mxu0 0.0
        %380 = vmatprep.subr.mxu0 0.0
        %381 = vmatpush2.msra.mxu0 0.0
        %382 = vmatprep.subr.mxu0 0.0
        %383 = vmatpush2.msra.mxu0 0.0
        %384 = vmatprep.subr.mxu0 0.0
        %385 = vmatpush2.msra.mxu0 0.0
        %386 = vmatprep.subr.mxu0 0.0
        %387 = vmatpush2.msra.mxu0 0.0
        %388 = vmatprep.subr.mxu0 0.0
        %389 = vmatpush2.msra.mxu0 0.0
        %390 = vmatprep.subr.mxu0 0.0
        %391 = vmatpush2.msra.mxu0 0.0
        %392 = vmatprep.subr.mxu0 0.0
        %393 = vmatpush2.msra.mxu0 0.0
        %394 = vmatprep.subr.mxu0 0.0
        %395 = vmatpush2.msra.mxu0 0.0
        %396 = vmatprep.subr.mxu0 0.0
        %397 = vmatpush2.msra.mxu0 0.0
        %398 = vmatprep.subr.mxu0 0.0
        %399 = vmatpush2.msra.mxu0 0.0
        %400 = vmatprep.mubr.f32.mxu0 0.0
        %401 = vmatmul.mubr.f32.gmra.mxu0 %v302
        %v402 = vpop.f32.mrf.mxu0
        %v403 = vadd.f32 0.0, %v402
        %v404 = vpop.f32.mrf.mxu0
        %405 = vmatprep.mubr.f32.mxu0 0.0
        %406 = vmatmul.mubr.f32.gmra.mxu0 %v303
        %v407 = vpop.f32.mrf.mxu0
        %v408 = vadd.f32 0.0, %v407
        %v409 = vpop.f32.mrf.mxu0
        %410 = vmatprep.mubr.f32.mxu0 0.0
        %411 = vmatmul.mubr.f32.gmra.mxu0 %v304
        %v412 = vpop.f32.mrf.mxu0
        %v413 = vadd.f32 0.0, %v412
        %v414 = vpop.f32.mrf.mxu0
        %415 = vmatprep.mubr.f32.mxu0 0.0
        %416 = vmatmul.mubr.f32.gmra.mxu0 %v305
        %v417 = vpop.f32.mrf.mxu0
        %v418 = vadd.f32 0.0, %v417
        %v419 = vpop.f32.mrf.mxu0
        %420 = vmatprep.mubr.f32.mxu0 0.0
        %421 = vmatmul.mubr.f32.gmra.mxu0 %v306
        %v422 = vpop.f32.mrf.mxu0
        %v423 = vadd.f32 0.0, %v422
        %v424 = vpop.f32.mrf.mxu0
        %425 = vmatprep.mubr.f32.mxu0 0.0
        %426 = vmatmul.mubr.f32.gmra.mxu0 %v307
        %v427 = vpop.f32.mrf.mxu0
        %v428 = vadd.f32 0.0, %v427
        %v429 = vpop.f32.mrf.mxu0
        %430 = vmatprep.mubr.f32.mxu0 0.0
        %431 = vmatmul.mubr.f32.gmra.mxu0 %v308
        %v432 = vpop.f32.mrf.mxu0
        %v433 = vadd.f32 0.0, %v432
        %v434 = vpop.f32.mrf.mxu0
        %435 = vmatprep.mubr.f32.mxu0 0.0
        %436 = vmatmul.mubr.f32.gmra.mxu0 %v309
        %v437 = vpop.f32.mrf.mxu0
        %v438 = vadd.f32 0.0, %v437
        %v439 = vpop.f32.mrf.mxu0
        %440 = vdwg.mxu0
        %v441 = vadd.f32 %v328, %v403
        %v442 = vadd.f32 %v329, %v408
        %v443 = vadd.f32 %v330, %v413
        %v444 = vadd.f32 %v331, %v418
        %v445 = vadd.f32 %v332, %v423
        %v446 = vadd.f32 %v333, %v428
        %v447 = vadd.f32 %v334, %v433
        %v448 = vadd.f32 %v335, %v438
        %449 = vst [vmem:[#allocation2] sm:$0xff] %v441
        %450 = vst [vmem:[#allocation2 + $0x8] sm:$0xff] %v442
        %451 = vst [vmem:[#allocation2 + $0x10] sm:$0xff] %v443
        %452 = vst [vmem:[#allocation2 + $0x18] sm:$0xff] %v444
        %453 = vst [vmem:[#allocation2 + $0x20] sm:$0xff] %v445
        %454 = vst [vmem:[#allocation2 + $0x28] sm:$0xff] %v446
        %455 = vst [vmem:[#allocation2 + $0x30] sm:$0xff] %v447
        %456 = vst [vmem:[#allocation2 + $0x38] sm:$0xff] %v448
        // Predicated region
        $region57: #{tpu_custom_call.1} parent=39 // pred_check
          %p457 = pneg %p290
        $region58: #{tpu_custom_call.1} parent=39 // pred_check_branch
          %459 = sbr.rel (%p457) target = $region60
        $region59: #{tpu_custom_call.1} parent=39 // pred_region
          %v460 = vld [vmem:[#allocation2] sm:$0xff]
          %v461 = vld [vmem:[#allocation2 + $0x8] sm:$0xff]
          %v462 = vld [vmem:[#allocation2 + $0x10] sm:$0xff]
          %v463 = vld [vmem:[#allocation2 + $0x18] sm:$0xff]
          %v464 = vld [vmem:[#allocation2 + $0x20] sm:$0xff]
          %v465 = vld [vmem:[#allocation2 + $0x28] sm:$0xff]
          %v466 = vld [vmem:[#allocation2 + $0x30] sm:$0xff]
          %v467 = vld [vmem:[#allocation2 + $0x38] sm:$0xff]
          %v468 = vld [vmem:[#allocation9] sm:$0xff]
          %v469 = vld [vmem:[#allocation9 + $0x8] sm:$0xff]
          %v470 = vld [vmem:[#allocation9 + $0x10] sm:$0xff]
          %v471 = vld [vmem:[#allocation9 + $0x18] sm:$0xff]
          %v472 = vld [vmem:[#allocation9 + $0x20] sm:$0xff]
          %v473 = vld [vmem:[#allocation9 + $0x28] sm:$0xff]
          %v474 = vld [vmem:[#allocation9 + $0x30] sm:$0xff]
          %v475 = vld [vmem:[#allocation9 + $0x38] sm:$0xff]
          %v476 = vld [vmem:[#allocation9 + $0x40] sm:$0xff]
          %v477 = vld [vmem:[#allocation9 + $0x48] sm:$0xff]
          %v478 = vld [vmem:[#allocation9 + $0x50] sm:$0xff]
          %v479 = vld [vmem:[#allocation9 + $0x58] sm:$0xff]
          %v480 = vld [vmem:[#allocation9 + $0x60] sm:$0xff]
          %v481 = vld [vmem:[#allocation9 + $0x68] sm:$0xff]
          %v482 = vld [vmem:[#allocation9 + $0x70] sm:$0xff]
          %v483 = vld [vmem:[#allocation9 + $0x78] sm:$0xff]
          %v484 = vld [vmem:[%s3] sm:$0x1]
          %v486 = vlaneseq
          %v487 = vshrl.u32 %v486, 7
          %v488 = vsub.s32 0, %v487
          %v489 = vrot.slane %v484, %v488
          %491 = vmatprep.subr.mxu0 0.0
          %492 = vmatpush1.msra.mxu0 %v483
          %493 = vmatprep.subr.mxu0 0.0
          %494 = vmatpush1.msra.mxu0 %v482
          %495 = vmatprep.subr.mxu0 0.0
          %496 = vmatpush1.msra.mxu0 %v481
          %497 = vmatprep.subr.mxu0 0.0
          %498 = vmatpush1.msra.mxu0 %v480
          %499 = vmatprep.subr.mxu0 0.0
          %500 = vmatpush1.msra.mxu0 %v479
          %501 = vmatprep.subr.mxu0 0.0
          %502 = vmatpush1.msra.mxu0 %v478
          %503 = vmatprep.subr.mxu0 0.0
          %504 = vmatpush1.msra.mxu0 %v477
          %505 = vmatprep.subr.mxu0 0.0
          %506 = vmatpush1.msra.mxu0 %v476
          %507 = vmatprep.subr.mxu0 0.0
          %508 = vmatpush1.msra.mxu0 %v475
          %509 = vmatprep.subr.mxu0 0.0
          %510 = vmatpush1.msra.mxu0 %v474
          %511 = vmatprep.subr.mxu0 0.0
          %512 = vmatpush1.msra.mxu0 %v473
          %513 = vmatprep.subr.mxu0 0.0
          %514 = vmatpush1.msra.mxu0 %v472
          %515 = vmatprep.subr.mxu0 0.0
          %516 = vmatpush1.msra.mxu0 %v471
          %517 = vmatprep.subr.mxu0 0.0
          %518 = vmatpush1.msra.mxu0 %v470
          %519 = vmatprep.subr.mxu0 0.0
          %520 = vmatpush1.msra.mxu0 %v469
          %521 = vmatprep.subr.mxu0 0.0
          %522 = vmatpush1.msra.mxu0 %v468
          %523 = vmatprep.subr.mxu0 0.0
          %524 = vmatpush2.msra.mxu0 0.0
          %525 = vmatprep.subr.mxu0 0.0
          %526 = vmatpush2.msra.mxu0 0.0
          %527 = vmatprep.subr.mxu0 0.0
          %528 = vmatpush2.msra.mxu0 0.0
          %529 = vmatprep.subr.mxu0 0.0
          %530 = vmatpush2.msra.mxu0 0.0
          %531 = vmatprep.subr.mxu0 0.0
          %532 = vmatpush2.msra.mxu0 0.0
          %533 = vmatprep.subr.mxu0 0.0
          %534 = vmatpush2.msra.mxu0 0.0
          %535 = vmatprep.subr.mxu0 0.0
          %536 = vmatpush2.msra.mxu0 0.0
          %537 = vmatprep.subr.mxu0 0.0
          %538 = vmatpush2.msra.mxu0 0.0
          %539 = vmatprep.subr.mxu0 0.0
          %540 = vmatpush2.msra.mxu0 0.0
          %541 = vmatprep.subr.mxu0 0.0
          %542 = vmatpush2.msra.mxu0 0.0
          %543 = vmatprep.subr.mxu0 0.0
          %544 = vmatpush2.msra.mxu0 0.0
          %545 = vmatprep.subr.mxu0 0.0
          %546 = vmatpush2.msra.mxu0 0.0
          %547 = vmatprep.subr.mxu0 0.0
          %548 = vmatpush2.msra.mxu0 0.0
          %549 = vmatprep.subr.mxu0 0.0
          %550 = vmatpush2.msra.mxu0 0.0
          %551 = vmatprep.subr.mxu0 0.0
          %552 = vmatpush2.msra.mxu0 0.0
          %553 = vmatprep.subr.mxu0 0.0
          %554 = vmatpush2.msra.mxu0 0.0
          %555 = vmatprep.mubr.f32.mxu0 0.0
          %556 = vmatmul.mubr.f32.gmra.mxu0 %v460
          %v557 = vpop.f32.mrf.mxu0
          %v558 = vadd.f32 %v489, %v557
          %v559 = vpop.f32.mrf.mxu0
          %560 = vmatprep.mubr.f32.mxu0 0.0
          %561 = vmatmul.mubr.f32.gmra.mxu0 %v461
          %v562 = vpop.f32.mrf.mxu0
          %v563 = vadd.f32 %v489, %v562
          %v564 = vpop.f32.mrf.mxu0
          %565 = vmatprep.mubr.f32.mxu0 0.0
          %566 = vmatmul.mubr.f32.gmra.mxu0 %v462
          %v567 = vpop.f32.mrf.mxu0
          %v568 = vadd.f32 %v489, %v567
          %v569 = vpop.f32.mrf.mxu0
          %570 = vmatprep.mubr.f32.mxu0 0.0
          %571 = vmatmul.mubr.f32.gmra.mxu0 %v463
          %v572 = vpop.f32.mrf.mxu0
          %v573 = vadd.f32 %v489, %v572
          %v574 = vpop.f32.mrf.mxu0
          %575 = vmatprep.mubr.f32.mxu0 0.0
          %576 = vmatmul.mubr.f32.gmra.mxu0 %v464
          %v577 = vpop.f32.mrf.mxu0
          %v578 = vadd.f32 %v489, %v577
          %v579 = vpop.f32.mrf.mxu0
          %580 = vmatprep.mubr.f32.mxu0 0.0
          %581 = vmatmul.mubr.f32.gmra.mxu0 %v465
          %v582 = vpop.f32.mrf.mxu0
          %v583 = vadd.f32 %v489, %v582
          %v584 = vpop.f32.mrf.mxu0
          %585 = vmatprep.mubr.f32.mxu0 0.0
          %586 = vmatmul.mubr.f32.gmra.mxu0 %v466
          %v587 = vpop.f32.mrf.mxu0
          %v588 = vadd.f32 %v489, %v587
          %v589 = vpop.f32.mrf.mxu0
          %590 = vmatprep.mubr.f32.mxu0 0.0
          %591 = vmatmul.mubr.f32.gmra.mxu0 %v467
          %v592 = vpop.f32.mrf.mxu0
          %v593 = vadd.f32 %v489, %v592
          %v594 = vpop.f32.mrf.mxu0
          %595 = vdwg.mxu0
          %s596 = sld [smem:[#allocation3]]
          %vm597 = vcmp.ge.f32.partialorder %v558, 0.0
          %vm598 = vcmp.ge.f32.partialorder %v563, 0.0
          %vm599 = vcmp.ge.f32.partialorder %v568, 0.0
          %vm600 = vcmp.ge.f32.partialorder %v573, 0.0
          %vm601 = vcmp.ge.f32.partialorder %v578, 0.0
          %vm602 = vcmp.ge.f32.partialorder %v583, 0.0
          %vm603 = vcmp.ge.f32.partialorder %v588, 0.0
          %vm604 = vcmp.ge.f32.partialorder %v593, 0.0
          %v605 = vstv %s596
          %v606 = vmul.f32 %v605, %v558
          %v607 = vmul.f32 %v605, %v563
          %v608 = vmul.f32 %v605, %v568
          %v609 = vmul.f32 %v605, %v573
          %v610 = vmul.f32 %v605, %v578
          %v611 = vmul.f32 %v605, %v583
          %v612 = vmul.f32 %v605, %v588
          %v613 = vmul.f32 %v605, %v593
          %v614 = vsel %vm597, %v558, %v606
          %v615 = vsel %vm598, %v563, %v607
          %v616 = vsel %vm599, %v568, %v608
          %v617 = vsel %vm600, %v573, %v609
          %v618 = vsel %vm601, %v578, %v610
          %v619 = vsel %vm602, %v583, %v611
          %v620 = vsel %vm603, %v588, %v612
          %v621 = vsel %vm604, %v593, %v613
          %622 = vst [vmem:[%s287] sm:$0xff] %v614
          %623 = vst [vmem:[%s287 + $0x8] sm:$0xff] %v615
          %624 = vst [vmem:[%s287 + $0x10] sm:$0xff] %v616
          %625 = vst [vmem:[%s287 + $0x18] sm:$0xff] %v617
          %626 = vst [vmem:[%s287 + $0x20] sm:$0xff] %v618
          %627 = vst [vmem:[%s287 + $0x28] sm:$0xff] %v619
          %628 = vst [vmem:[%s287 + $0x30] sm:$0xff] %v620
          %629 = vst [vmem:[%s287 + $0x38] sm:$0xff] %v621
        $region60: #{tpu_custom_call.1} parent=39 // pred_fallthru
          _
        %s630 = sand.u32 %s156, 1
        %s631 = scalar_lea.sflag [#allocation6], %s630
        %s632 = sand.u32 %s156, 1
        %s633 = smul.addr %s632, 64
        %s634 = scalar_lea.vmem [#allocation10], %s633
        // Predicated region
        $region61: #{tpu_custom_call.1} parent=39 // pred_check
          %p635 = pneg %p166
        $region62: #{tpu_custom_call.1} parent=39 // pred_check_branch
          %637 = sbr.rel (%p635) target = $region64
        $region63: #{tpu_custom_call.1} parent=39 // pred_region
          %s638 = smul.u32 8, %s28
          %s640 = ssub.s32 1024, 1024
          %641 = vsyncadd %s631, %s640
          %s642 = smul.addr %s638, 128
          %s643 = scalar_lea.hbm %s5, %s642
          %s644 = sshll.u32 %s634, 4
          %s645 = int_to_ptr.vmem [resolvable:$true] %s644
          %650 = dma.vmem_to_hbm [thread:$0]  %s645, 1024, %s643, %s631, 128, 128, 8
        $region64: #{tpu_custom_call.1} parent=39 // pred_fallthru
          _
      $region40: #{tpu_custom_call.1} parent=5 // pred_fallthru
        _
      %p651 = scmp.le.s32.totalorder 2, %s19
      // Predicated region
      $region65: #{tpu_custom_call.1} parent=5 // pred_check
        %p652 = pneg %p651
      $region66: #{tpu_custom_call.1} parent=5 // pred_check_branch
        %654 = sbr.rel (%p652) target = $region68
      $region67: #{tpu_custom_call.1} parent=5 // pred_region
        %s655 = ssub.s32 %s19, 2
        // Predicated region
        $region69: #{tpu_custom_call.1} parent=67 // pred_check
          %p656 = pneg %p172
        $region70: #{tpu_custom_call.1} parent=67 // pred_check_branch
          %658 = sbr.rel (%p656) target = $region72
        $region71: #{tpu_custom_call.1} parent=67 // pred_region
          %s659 = sand.u32 %s157, 1
          %s660 = scalar_lea.sflag [#allocation6], %s659
          %s661 = sand.u32 %s157, 1
          %s662 = smul.addr %s661, 64
          %s663 = scalar_lea.vmem [#allocation10], %s662
          %664 = dma.done %s660, 1024
        $region72: #{tpu_custom_call.1} parent=67 // pred_fallthru
          _
      $region68: #{tpu_custom_call.1} parent=5 // pred_fallthru
        _
    $region6: #{tpu_custom_call.1} parent=1 // loop_footer
      %s23 = sadd.s32 1, %s19
    $region7: #{tpu_custom_call.1} parent=1 // loop_footer_branch
      %18 = sbr.rel target = $region3
    $region8: #{tpu_custom_call.1} parent=1 // loop_exit
      _
    %665 = vsyncpa [#allocation5], 1
    %s666 = scalar_lea.sflag [#allocation5], 1
    %667 = vsyncpa %s666, 1
    %668 = vsyncpa [#allocation8], 1
    %669 = vsyncpa [#allocation6], 1
    %s670 = scalar_lea.sflag [#allocation6], 1
    %671 = vsyncpa %s670, 1

</llo_original>
